<compile_context>
chip_gen: v7x
topology: tpu7x:2x2x1
jax: 0.10.0
libtpu: 0.0.40
codegen_flags: <defaults>
</compile_context>

<pallas_src>
import functools

import jax
import jax.numpy as jnp
from jax.experimental import pallas as pl
from jax.experimental.pallas import tpu as pltpu


# --------------------------------------------------------------------------
# Kernel
# --------------------------------------------------------------------------
def _self_output_kernel(h_ref, res_ref, w_ref, p_ref, o_ref, *, eps):
    # ---- dense: y = h @ W  (bf16 MXU operands, f32 accumulation) ----
    y = jnp.dot(h_ref[...].astype(jnp.bfloat16), w_ref[...],
                preferred_element_type=jnp.float32)            # (tm, D) f32

    # TODO(synk): training-mode dropout (PRNG mask) is not implemented;
    # dropout is identity at inference, matching eval() semantics.

    # ---- bias + residual + LayerNorm, all statistics in f32 ----
    bias = p_ref[0:1, :]                                        # (1, D) f32
    gamma = p_ref[1:2, :]
    beta = p_ref[2:3, :]

    y = y + bias + res_ref[...].astype(jnp.float32)
    mu = jnp.mean(y, axis=-1, keepdims=True)
    c = y - mu
    var = jnp.mean(c * c, axis=-1, keepdims=True)               # two-pass (stable)
    out = c * jax.lax.rsqrt(var + eps)
    o_ref[...] = (out * gamma + beta).astype(o_ref.dtype)


# --------------------------------------------------------------------------
# Tiling / VMEM budgeting
# --------------------------------------------------------------------------
_VMEM_BUDGET = 40 * 1024 * 1024   # conservative: fits v7x (64 MiB physical)


def _choose_row_tile(M, D, act_bytes, out_bytes, weight_bytes):
    """Pick a row tile (multiple of 8, dividing M) from working-set math."""
    cands = [t for t in (2048, 1024, 512, 256, 128, 64, 32, 16, 8) if M % t == 0]
    if not cands:
        cands = [M]

    def per_step_bytes(t):
        return t * D * (2 * act_bytes + out_bytes)      # h + res in, out

    def fits(t):
        # resident weight/params + double-buffered per-step traffic
        return weight_bytes + 2 * per_step_bytes(t) <= _VMEM_BUDGET

    fitting = [t for t in cands if fits(t)] or [cands[-1]]

    # Large problems: prefer >=4 even grid steps with tm >= 256 so a megacore
    # (v7x) splits evenly and each TC still double-buffers.  Otherwise take the
    # single largest fitting tile (best on single-TC v5e/v6e, small M).
    for t in fitting:
        steps = M // t
        if t >= 256 and steps >= 4 and steps % 2 == 0:
            return t
    return fitting[0]


# --------------------------------------------------------------------------
# Parameter prep (call ONCE at init, not per forward)
# --------------------------------------------------------------------------
def prepare_params(dense_w, dense_b, ln_g, ln_b):
    """dense_w is stored transposed as (in_features, out_features): y = x @ W + b."""
    return {
        "w": dense_w.astype(jnp.bfloat16),                            # (D, D) bf16
        "p": jnp.stack([dense_b, ln_g, ln_b]).astype(jnp.float32),    # (3, D) f32
    }


# --------------------------------------------------------------------------
# Forward wrapper
# --------------------------------------------------------------------------
def blip2_qformer_self_output(hidden_states, input_tensor, params, *, eps=1e-12):
    B, S, D = hidden_states.shape
    M = B * S

    x = hidden_states.reshape(M, D)
    r = input_tensor.reshape(M, D)

    # Cold path only: Blip2 query length (32) makes M a multiple of 8 already.
    padded = M % 8 != 0
    M_work = ((M + 7) // 8) * 8 if padded else M
    if padded:
        x = jnp.pad(x, ((0, M_work - M), (0, 0)))
        r = jnp.pad(r, ((0, M_work - M), (0, 0)))

    act_bytes = x.dtype.itemsize
    out_bytes = hidden_states.dtype.itemsize
    weight_bytes = D * D * 2 + 3 * D * 4

    tm = _choose_row_tile(M_work, D, act_bytes, out_bytes, weight_bytes)
    grid = (M_work // tm,)

    vmem_need = weight_bytes + 2 * tm * D * (2 * act_bytes + out_bytes)
    vmem_limit = min(max(2 * vmem_need, 16 * 1024 * 1024), 48 * 1024 * 1024)

    kern = functools.partial(_self_output_kernel, eps=eps)

    bytes_accessed = (M_work * D * 2 * act_bytes      # x + r
                      + weight_bytes                  # weight + packed params
                      + M_work * D * out_bytes)       # output
    cost = pl.CostEstimate(flops=2 * M_work * D * D + 10 * M_work * D,
                           transcendentals=M_work,    # one rsqrt per row
                           bytes_accessed=bytes_accessed)

    out = pl.pallas_call(
        kern,
        out_shape=jax.ShapeDtypeStruct((M_work, D), hidden_states.dtype),
        grid=grid,
        in_specs=[
            pl.BlockSpec((tm, D), lambda i: (i, 0)),   # hidden_states rows
            pl.BlockSpec((tm, D), lambda i: (i, 0)),   # residual rows
            pl.BlockSpec((D, D), lambda i: (0, 0)),    # bf16 weight, VMEM-resident
            pl.BlockSpec((3, D), lambda i: (0, 0)),    # [bias; gamma; beta], resident
        ],
        out_specs=pl.BlockSpec((tm, D), lambda i: (i, 0)),
        compiler_params=pltpu.CompilerParams(
            dimension_semantics=("parallel",),
            vmem_limit_bytes=vmem_limit),
        cost_estimate=cost,
    )(x, r, params["w"], params["p"])

    if padded:
        out = out[:M]
    return out.reshape(B, S, D)


# --------------------------------------------------------------------------
# Pure-JAX reference (f32) mirroring the PyTorch forward
# --------------------------------------------------------------------------
def reference(hidden_states, input_tensor, dense_w, dense_b, ln_g, ln_b, *, eps=1e-12):
    y = hidden_states @ dense_w + dense_b
    y = y + input_tensor                                  # dropout = identity
    mu = y.mean(-1, keepdims=True)
    var = ((y - mu) ** 2).mean(-1, keepdims=True)
    return (y - mu) / jnp.sqrt(var + eps) * ln_g + ln_b


if __name__ == "__main__":
    # Small config: batch=2, seq=8, hidden=128 (lane-dense last dim),
    # layer_norm_eps=1e-12 as in Blip2.
    B, S, D = 2, 8, 128
    eps = 1e-12

    key = jax.random.PRNGKey(0)
    ks = jax.random.split(key, 6)
    scl = 0.02
    dense_w = scl * jax.random.normal(ks[0], (D, D), jnp.float32)   # (in, out)
    dense_b = scl * jax.random.normal(ks[1], (D,), jnp.float32)
    ln_g = 1.0 + 0.1 * jax.random.normal(ks[2], (D,), jnp.float32)
    ln_b = scl * jax.random.normal(ks[3], (D,), jnp.float32)

    # Activations carried in bf16 (HBM-facing dtype); compute stays f32 in-kernel.
    hidden_states = jax.random.normal(ks[4], (B, S, D), jnp.float32).astype(jnp.bfloat16)
    input_tensor = jax.random.normal(ks[5], (B, S, D), jnp.float32).astype(jnp.bfloat16)

    prepared = prepare_params(dense_w, dense_b, ln_g, ln_b)   # one-time init cost

    out = blip2_qformer_self_output(hidden_states, input_tensor, prepared, eps=eps)
    out = jax.block_until_ready(out)

    ref = reference(hidden_states.astype(jnp.float32), input_tensor.astype(jnp.float32),
                    dense_w, dense_b, ln_g, ln_b, eps=eps)
    out_f32 = out.astype(jnp.float32)
    if not jnp.allclose(out_f32, ref, atol=5e-2, rtol=5e-2):
        err = float(jnp.max(jnp.abs(out_f32 - ref)))
        raise AssertionError(f"Pallas output does not match reference (max abs err {err})")

    print("KERNEL_OK")
</pallas_src>

<mosaic_0001>
module attributes {stable_mosaic.version = 11 : i64} {
  func.func @_self_output_kernel(%arg0: i32, %arg1: memref<16x128xbf16, #tpu.memory_space<vmem>>, %arg2: memref<16x128xbf16, #tpu.memory_space<vmem>>, %arg3: memref<128x128xbf16, #tpu.memory_space<vmem>>, %arg4: memref<3x128xf32, #tpu.memory_space<vmem>>, %arg5: memref<16x128xbf16, #tpu.memory_space<vmem>>) attributes {dimension_semantics = [#tpu.dimension_semantics<parallel>], iteration_bounds = array<i64: 1>, scalar_prefetch = 0 : i64, scratch_operands = 0 : i64, tpu.core_type = #tpu.core_type<tc>, window_params = [{transform_indices = @transform_0, window_bounds = array<i64: 16, 128>}, {transform_indices = @transform_1, window_bounds = array<i64: 16, 128>}, {pipeline_mode = #tpu.pipeline_mode<synchronous>, transform_indices = @transform_2, window_bounds = array<i64: 128, 128>}, {pipeline_mode = #tpu.pipeline_mode<synchronous>, transform_indices = @transform_3, window_bounds = array<i64: 3, 128>}, {transform_indices = @transform_4, window_bounds = array<i64: 16, 128>}]} {
    %c0 = arith.constant 0 : index
    %c0_0 = arith.constant 0 : index
    %0 = vector.load %arg1[%c0, %c0_0] : memref<16x128xbf16, #tpu.memory_space<vmem>>, vector<16x128xbf16>
    %c0_1 = arith.constant 0 : index
    %c0_2 = arith.constant 0 : index
    %1 = vector.load %arg3[%c0_1, %c0_2] : memref<128x128xbf16, #tpu.memory_space<vmem>>, vector<128x128xbf16>
    %cst = arith.constant dense<0.000000e+00> : vector<16x128xf32>
    %2 = tpu.matmul %0, %1, %cst {dimension_numbers = #tpu.dot_dimension_numbers<[1], [0], [0], [1], [0, 0, 1, 1], [], []>} : vector<16x128xbf16>, vector<128x128xbf16>, vector<16x128xf32> -> vector<16x128xf32>
    %c0_3 = arith.constant 0 : index
    %c0_4 = arith.constant 0 : index
    %3 = vector.load %arg4[%c0_3, %c0_4] : memref<3x128xf32, #tpu.memory_space<vmem>>, vector<1x128xf32>
    %c1 = arith.constant 1 : index
    %c0_5 = arith.constant 0 : index
    %4 = vector.load %arg4[%c1, %c0_5] : memref<3x128xf32, #tpu.memory_space<vmem>>, vector<1x128xf32>
    %c2 = arith.constant 2 : index
    %c0_6 = arith.constant 0 : index
    %5 = vector.load %arg4[%c2, %c0_6] : memref<3x128xf32, #tpu.memory_space<vmem>>, vector<1x128xf32>
    %6 = vector.broadcast %3 : vector<1x128xf32> to vector<16x128xf32>
    %7 = arith.addf %2, %6 : vector<16x128xf32>
    %c0_7 = arith.constant 0 : index
    %c0_8 = arith.constant 0 : index
    %8 = vector.load %arg2[%c0_7, %c0_8] : memref<16x128xbf16, #tpu.memory_space<vmem>>, vector<16x128xbf16>
    %9 = arith.extf %8 : vector<16x128xbf16> to vector<16x128xf32>
    %10 = arith.addf %7, %9 : vector<16x128xf32>
    %cst_9 = arith.constant dense<0.000000e+00> : vector<16xf32>
    %11 = vector.multi_reduction <add>, %10, %cst_9 [1] : vector<16x128xf32> to vector<16xf32>
    %12 = vector.shape_cast %11 : vector<16xf32> to vector<16x1xf32>
    %cst_10 = arith.constant 1.280000e+02 : f32
    %13 = vector.broadcast %cst_10 : f32 to vector<16x1xf32>
    %14 = arith.divf %12, %13 : vector<16x1xf32>
    %15 = vector.broadcast %14 : vector<16x1xf32> to vector<16x128xf32>
    %16 = arith.subf %10, %15 : vector<16x128xf32>
    %17 = arith.mulf %16, %16 : vector<16x128xf32>
    %cst_11 = arith.constant dense<0.000000e+00> : vector<16xf32>
    %18 = vector.multi_reduction <add>, %17, %cst_11 [1] : vector<16x128xf32> to vector<16xf32>
    %19 = vector.shape_cast %18 : vector<16xf32> to vector<16x1xf32>
    %cst_12 = arith.constant 1.280000e+02 : f32
    %20 = vector.broadcast %cst_12 : f32 to vector<16x1xf32>
    %21 = arith.divf %19, %20 : vector<16x1xf32>
    %cst_13 = arith.constant 9.99999996E-13 : f32
    %22 = vector.broadcast %cst_13 : f32 to vector<16x1xf32>
    %23 = arith.addf %21, %22 : vector<16x1xf32>
    %24 = math.rsqrt %23 : vector<16x1xf32>
    %25 = vector.broadcast %24 : vector<16x1xf32> to vector<16x128xf32>
    %26 = arith.mulf %16, %25 : vector<16x128xf32>
    %27 = vector.broadcast %4 : vector<1x128xf32> to vector<16x128xf32>
    %28 = arith.mulf %26, %27 : vector<16x128xf32>
    %29 = vector.broadcast %5 : vector<1x128xf32> to vector<16x128xf32>
    %30 = arith.addf %28, %29 : vector<16x128xf32>
    %31 = arith.truncf %30 : vector<16x128xf32> to vector<16x128xbf16>
    %c0_14 = arith.constant 0 : index
    %c0_15 = arith.constant 0 : index
    %32 = vector.load %arg5[%c0_14, %c0_15] : memref<16x128xbf16, #tpu.memory_space<vmem>>, vector<16x128xbf16>
    tpu.vector_store %arg5[%c0_14, %c0_15], %31 {strides = array<i32>} : memref<16x128xbf16, #tpu.memory_space<vmem>>, vector<16x128xbf16>,
    return
  }
  func.func @transform_0(%arg0: i32) -> (i32, i32) {
    %c0_i32 = arith.constant 0 : i32
    %c0_i32_0 = arith.constant 0 : i32
    return %arg0, %c0_i32 : i32, i32
  }
  func.func @transform_1(%arg0: i32) -> (i32, i32) {
    %c0_i32 = arith.constant 0 : i32
    %c0_i32_0 = arith.constant 0 : i32
    return %arg0, %c0_i32 : i32, i32
  }
  func.func @transform_2(%arg0: i32) -> (i32, i32) {
    %c0_i32 = arith.constant 0 : i32
    %c0_i32_0 = arith.constant 0 : i32
    %c0_i32_1 = arith.constant 0 : i32
    return %c0_i32, %c0_i32_0 : i32, i32
  }
  func.func @transform_3(%arg0: i32) -> (i32, i32) {
    %c0_i32 = arith.constant 0 : i32
    %c0_i32_0 = arith.constant 0 : i32
    %c0_i32_1 = arith.constant 0 : i32
    return %c0_i32, %c0_i32_0 : i32, i32
  }
  func.func @transform_4(%arg0: i32) -> (i32, i32) {
    %c0_i32 = arith.constant 0 : i32
    %c0_i32_0 = arith.constant 0 : i32
    return %arg0, %c0_i32 : i32, i32
  }
}

</mosaic_0001>

<llo_original>
// kernel: tpu_custom_call.1
$region0: #{tpu_custom_call.1}
  #allocation0 [shape = 'u32[]', space=smem, size = 0x4, offset = 0x4, fixed_abs, tag = 'smem constant byte address 0x4 - core index']
  #allocation1 [shape = 'u32[144,128]{1,0:T(1,128)}', space=vmem, size = 0x12000, scoped, tag = 'internal scratch']
  %s0 = inlined_call_operand.hbm [shape: bf16[16,128], index: 0, kind: input, shape index: {}]
  %s1 = inlined_call_operand.hbm [shape: bf16[16,128], index: 1, kind: input, shape index: {}]
  %s2 = inlined_call_operand.hbm [shape: bf16[128,128], index: 2, kind: input, shape index: {}]
  %s3 = inlined_call_operand.vmem [shape: f32[3,128], index: 3, kind: input, shape index: {}]
  %s4 = inlined_call_operand.hbm [shape: bf16[16,128], index: 4, kind: output, shape index: {}]
  %s5 = sld [smem:[#allocation0]]
  $region38: #{tpu_custom_call.1} parent=0
    _
  %s7 = ssub.s32 1, %s5
  %s8 = scalar_select 0, %s7, %s5
  $region1: #{tpu_custom_call.1} parent=0
    #allocation2 [shape = 'u8[4096]{0}', space=vmem, size = 0x1000, scoped, tag = 'input window, operand 0, single buffered']
    #allocation3 [shape = 's32[1]{0}', space=sflag, size = 0x4, scoped, tag = 'scoped memory for tpu_custom_call.1']
    #allocation4 [shape = 's32[1]{0}', space=sflag, size = 0x4, scoped, tag = 'scoped memory for tpu_custom_call.1']
    #allocation5 [shape = 'u8[4096]{0}', space=vmem, size = 0x1000, scoped, tag = 'input window, operand 1, single buffered']
    #allocation6 [shape = 's32[1]{0}', space=sflag, size = 0x4, scoped, tag = 'scoped memory for tpu_custom_call.1']
    #allocation7 [shape = 'u8[32768]{0}', space=vmem, size = 0x8000, scoped, tag = 'input window, operand 2, single buffered']
    #allocation8 [shape = 'u8[4096]{0}', space=vmem, size = 0x1000, scoped, tag = 'output window, operand 0, single buffered']
    %9 = vsyncpa [#allocation3], 0
    %10 = vsyncpa [#allocation6], 0
    %11 = vsyncpa [#allocation4], 0
    // Predicated region
    $region2: #{tpu_custom_call.1} parent=1 // pred_check
      _
    $region3: #{tpu_custom_call.1} parent=1 // pred_check_branch
      %13 = sbr.rel (0) target = $region5
    $region4: #{tpu_custom_call.1} parent=1 // pred_region
      %s15 = ssub.s32 128, 128
      %16 = vsyncadd [#allocation3], %s15
      %s17 = sshll.u32 [#allocation2], 4
      %s18 = int_to_ptr.vmem [resolvable:$true] %s17
      %23 = dma.hbm_to_vmem [thread:$0]  %s0, 128, %s18, [#allocation3], 64, 64, 4
    $region5: #{tpu_custom_call.1} parent=1 // pred_fallthru
      _
    // Predicated region
    $region6: #{tpu_custom_call.1} parent=1 // pred_check
      _
    $region7: #{tpu_custom_call.1} parent=1 // pred_check_branch
      %25 = sbr.rel (0) target = $region9
    $region8: #{tpu_custom_call.1} parent=1 // pred_region
      %s27 = ssub.s32 128, 128
      %28 = vsyncadd [#allocation6], %s27
      %s29 = sshll.u32 [#allocation5], 4
      %s30 = int_to_ptr.vmem [resolvable:$true] %s29
      %35 = dma.hbm_to_vmem [thread:$0]  %s1, 128, %s30, [#allocation6], 64, 64, 4
    $region9: #{tpu_custom_call.1} parent=1 // pred_fallthru
      _
    // Predicated region
    $region10: #{tpu_custom_call.1} parent=1 // pred_check
      _
    $region11: #{tpu_custom_call.1} parent=1 // pred_check_branch
      %37 = sbr.rel (0) target = $region13
    $region12: #{tpu_custom_call.1} parent=1 // pred_region
      %s39 = ssub.s32 1024, 1024
      %40 = vsyncadd [#allocation6], %s39
      %s41 = sshll.u32 [#allocation7], 4
      %s42 = int_to_ptr.vmem [resolvable:$true] %s41
      %47 = dma.hbm_to_vmem [thread:$0]  %s2, 1024, %s42, [#allocation6], 64, 64, 4
    $region13: #{tpu_custom_call.1} parent=1 // pred_fallthru
      _
    // Predicated region
    $region14: #{tpu_custom_call.1} parent=1 // pred_check
      _
    $region15: #{tpu_custom_call.1} parent=1 // pred_check_branch
      %49 = sbr.rel (0) target = $region17
    $region16: #{tpu_custom_call.1} parent=1 // pred_region
      _
    $region17: #{tpu_custom_call.1} parent=1 // pred_fallthru
      _
    // Predicated region
    $region18: #{tpu_custom_call.1} parent=1 // pred_check
      _
    $region19: #{tpu_custom_call.1} parent=1 // pred_check_branch
      %51 = sbr.rel (0) target = $region21
    $region20: #{tpu_custom_call.1} parent=1 // pred_region
      %52 = dma.done [#allocation3], 128
    $region21: #{tpu_custom_call.1} parent=1 // pred_fallthru
      _
    // Predicated region
    $region22: #{tpu_custom_call.1} parent=1 // pred_check
      _
    $region23: #{tpu_custom_call.1} parent=1 // pred_check_branch
      %54 = sbr.rel (0) target = $region25
    $region24: #{tpu_custom_call.1} parent=1 // pred_region
      %55 = dma.done [#allocation6], 128
    $region25: #{tpu_custom_call.1} parent=1 // pred_fallthru
      _
    // Predicated region
    $region26: #{tpu_custom_call.1} parent=1 // pred_check
      _
    $region27: #{tpu_custom_call.1} parent=1 // pred_check_branch
      %57 = sbr.rel (0) target = $region29
    $region28: #{tpu_custom_call.1} parent=1 // pred_region
      %58 = dma.done [#allocation6], 1024
    $region29: #{tpu_custom_call.1} parent=1 // pred_fallthru
      _
    %v60 = vld [vmem:[#allocation2] sm:$0xf]
    %v61 = vld [vmem:[#allocation2 + $0x4] sm:$0xf]
    %v62 = vld [vmem:[#allocation7] sm:$0xf]
    %v63 = vld [vmem:[#allocation7 + $0x4] sm:$0xf]
    %v64 = vld [vmem:[#allocation7 + $0x8] sm:$0xf]
    %v65 = vld [vmem:[#allocation7 + $0xc] sm:$0xf]
    %v66 = vld [vmem:[#allocation7 + $0x10] sm:$0xf]
    %v67 = vld [vmem:[#allocation7 + $0x14] sm:$0xf]
    %v68 = vld [vmem:[#allocation7 + $0x18] sm:$0xf]
    %v69 = vld [vmem:[#allocation7 + $0x1c] sm:$0xf]
    %v70 = vld [vmem:[#allocation7 + $0x20] sm:$0xf]
    %v71 = vld [vmem:[#allocation7 + $0x24] sm:$0xf]
    %v72 = vld [vmem:[#allocation7 + $0x28] sm:$0xf]
    %v73 = vld [vmem:[#allocation7 + $0x2c] sm:$0xf]
    %v74 = vld [vmem:[#allocation7 + $0x30] sm:$0xf]
    %v75 = vld [vmem:[#allocation7 + $0x34] sm:$0xf]
    %v76 = vld [vmem:[#allocation7 + $0x38] sm:$0xf]
    %v77 = vld [vmem:[#allocation7 + $0x3c] sm:$0xf]
    %v78 = vld [vmem:[%s3] sm:$0x1]
    %v79 = vld [vmem:[%s3 + $0x1] sm:$0x1]
    %v80 = vld [vmem:[%s3 + $0x2] sm:$0x1]
    %v81 = vlaneseq
    %v82 = vshrl.u32 %v81, 7
    %v83 = vsub.s32 0, %v82
    %v84 = vrot.slane %v78, %v83
    %v87 = vunpack.c.l.b16 %v60
    %v88 = vunpack.c.l.b16 %v61
    %v89 = vpack.c.b16 %v88, %v87
    %v107 = vunpack.c.l.b16 %v62
    %v108 = vunpack.c.l.b16 %v63
    %v109 = vunpack.c.l.b16 %v64
    %v110 = vunpack.c.l.b16 %v65
    %v111 = vunpack.c.l.b16 %v66
    %v112 = vunpack.c.l.b16 %v67
    %v113 = vunpack.c.l.b16 %v68
    %v114 = vunpack.c.l.b16 %v69
    %v115 = vunpack.c.l.b16 %v70
    %v116 = vunpack.c.l.b16 %v71
    %v117 = vunpack.c.l.b16 %v72
    %v118 = vunpack.c.l.b16 %v73
    %v119 = vunpack.c.l.b16 %v74
    %v120 = vunpack.c.l.b16 %v75
    %v121 = vunpack.c.l.b16 %v76
    %v122 = vunpack.c.l.b16 %v77
    %v123 = vpack.c.b16 %v108, %v107
    %v124 = vpack.c.b16 %v110, %v109
    %v125 = vpack.c.b16 %v112, %v111
    %v126 = vpack.c.b16 %v114, %v113
    %v127 = vpack.c.b16 %v116, %v115
    %v128 = vpack.c.b16 %v118, %v117
    %v129 = vpack.c.b16 %v120, %v119
    %v130 = vpack.c.b16 %v122, %v121
    %139 = vmatprep.subr.bf16.mxu0 0
    %140 = vmatpush1.bf16.msra.mxu0 %v123
    %141 = vmatprep.subr.bf16.mxu0 0
    %142 = vmatpush1.bf16.msra.mxu0 %v124
    %143 = vmatprep.subr.bf16.mxu0 0
    %144 = vmatpush1.bf16.msra.mxu0 %v125
    %145 = vmatprep.subr.bf16.mxu0 0
    %146 = vmatpush1.bf16.msra.mxu0 %v126
    %147 = vmatprep.subr.bf16.mxu0 0
    %148 = vmatpush1.bf16.msra.mxu0 %v127
    %149 = vmatprep.subr.bf16.mxu0 0
    %150 = vmatpush1.bf16.msra.mxu0 %v128
    %151 = vmatprep.subr.bf16.mxu0 0
    %152 = vmatpush1.bf16.msra.mxu0 %v129
    %153 = vmatprep.subr.bf16.mxu0 0
    %154 = vmatpush1.bf16.msra.mxu0 %v130
    %155 = vmatprep.subr.bf16.mxu0 0
    %156 = vmatpush1.bf16.msra.mxu0 0
    %157 = vmatprep.subr.bf16.mxu0 0
    %158 = vmatpush1.bf16.msra.mxu0 0
    %159 = vmatprep.subr.bf16.mxu0 0
    %160 = vmatpush1.bf16.msra.mxu0 0
    %161 = vmatprep.subr.bf16.mxu0 0
    %162 = vmatpush1.bf16.msra.mxu0 0
    %163 = vmatprep.subr.bf16.mxu0 0
    %164 = vmatpush1.bf16.msra.mxu0 0
    %165 = vmatprep.subr.bf16.mxu0 0
    %166 = vmatpush1.bf16.msra.mxu0 0
    %167 = vmatprep.subr.bf16.mxu0 0
    %168 = vmatpush1.bf16.msra.mxu0 0
    %169 = vmatprep.subr.bf16.mxu0 0
    %170 = vmatpush1.bf16.msra.mxu0 0
    %171 = vmatprep.mubr.bf16.mxu0 0
    %172 = vmatmul.mubr.bf16.gmra.mrb[0].mxu0 %v89
    %v173 = vpop.f32.mrb[0].mxu0
    %v174 = vadd.f32 %v84, %v173
    %v175 = vpop.f32.mrb[0].mxu0
    %v176 = vpop.f32.mrb[0].mxu0
    %v177 = vadd.f32 %v84, %v176
    %v178 = vpop.f32.mrb[0].mxu0
    %179 = vdwg.mxu0
    %v180 = vld [vmem:[#allocation5] sm:$0xf]
    %v181 = vld [vmem:[#allocation5 + $0x4] sm:$0xf]
    %v182 = vunpack.c.l.bf16 %v180
    %v183 = vunpack.c.l.bf16 %v181
    %v184 = vadd.f32 %v174, %v182
    %v185 = vadd.f32 %v177, %v183
    %186 = vadd.xlane.f32.xlu0 %v184
    %v187 = vpop.xlane.xlu0 %186
    %188 = vadd.xlane.f32.xlu0 %v185
    %v189 = vpop.xlane.xlu0 %188
    %v190 = vrcp.pop 128.0
    %v191 = vmul.f32 %v187, %v190
    %v192 = vmul.f32 %v189, %v190
    %v193 = vsub.f32 %v184, %v191
    %v194 = vsub.f32 %v185, %v192
    %v195 = vmul.f32 %v193, %v193
    %v196 = vmul.f32 %v194, %v194
    %197 = vadd.xlane.f32.xlu0 %v195
    %v198 = vpop.xlane.xlu0 %197
    %199 = vadd.xlane.f32.xlu0 %v196
    %v200 = vpop.xlane.xlu0 %199
    %v201 = vmul.f32 %v198, %v190
    %v202 = vmul.f32 %v200, %v190
    %v203 = vadd.f32 %v201, 1e-12
    %v204 = vadd.f32 %v202, 1e-12
    %v205 = vrsqrt.pop %v203
    %v206 = vrsqrt.pop %v204
    %v207 = vmul.f32 %v193, %v205
    %v208 = vmul.f32 %v194, %v206
    %v209 = vlaneseq
    %v210 = vshrl.u32 %v209, 7
    %v211 = vsub.s32 0, %v210
    %v212 = vrot.slane %v79, %v211
    %v213 = vmul.f32 %v207, %v212
    %v214 = vmul.f32 %v208, %v212
    %v215 = vlaneseq
    %v216 = vshrl.u32 %v215, 7
    %v217 = vsub.s32 0, %v216
    %v218 = vrot.slane %v80, %v217
    %v219 = vadd.f32 %v213, %v218
    %v220 = vadd.f32 %v214, %v218
    %v221 = vpack.c.bf16 %v220, %v219
    %v223 = vunpack.c.l.b16 %v221
    %v224 = vunpack.c.h.b16 %v221
    %v225 = vpack.c.b16 %v223, %v223
    %v226 = vpack.c.b16 %v224, %v224
    %229 = vst [vmem:[#allocation8] sm:$0xf] %v225
    %230 = vst [vmem:[#allocation8 + $0x4] sm:$0xf] %v226
    // Predicated region
    $region30: #{tpu_custom_call.1} parent=1 // pred_check
      _
    $region31: #{tpu_custom_call.1} parent=1 // pred_check_branch
      %232 = sbr.rel (0) target = $region33
    $region32: #{tpu_custom_call.1} parent=1 // pred_region
      %s234 = ssub.s32 128, 128
      %235 = vsyncadd [#allocation4], %s234
      %s236 = sshll.u32 [#allocation8], 4
      %s237 = int_to_ptr.vmem [resolvable:$true] %s236
      %242 = dma.vmem_to_hbm [thread:$0]  %s237, 128, %s4, [#allocation4], 64, 64, 4
    $region33: #{tpu_custom_call.1} parent=1 // pred_fallthru
      _
    // Predicated region
    $region34: #{tpu_custom_call.1} parent=1 // pred_check
      _
    $region35: #{tpu_custom_call.1} parent=1 // pred_check_branch
      %244 = sbr.rel (0) target = $region37
    $region36: #{tpu_custom_call.1} parent=1 // pred_region
      %245 = dma.done [#allocation4], 128
    $region37: #{tpu_custom_call.1} parent=1 // pred_fallthru
      _
    %246 = vsyncpa [#allocation3], 1
    %247 = vsyncpa [#allocation6], 1
    %248 = vsyncpa [#allocation4], 1

</llo_original>
